<compile_context>
chip_gen: v6e
topology: v6e:2x2x1
jax: 0.10.0
libtpu: 0.0.40
codegen_flags: <defaults>
</compile_context>

<pallas_src>
import jax
import jax.numpy as jnp
from jax.experimental import pallas as pl
from jax.experimental.pallas import tpu as pltpu


# --------------------------------------------------------------------------
# Kernels
# --------------------------------------------------------------------------
def _head_kernel(x_ref, w1_ref, b1_ref, w2_ref, b2_ref, o_ref):
    # x_ref: (tm, H)   w1_ref: (H, H)      b1_ref: (1, H)  f32
    # w2_ref: (H, Lp)  b2_ref: (1, Lp) f32 o_ref:  (tm, L)  (L <= Lp)
    x = x_ref[...].astype(w1_ref.dtype)               # in-kernel cast -> MXU dtype
    h = jnp.dot(x, w1_ref[...], preferred_element_type=jnp.float32)
    h = jnp.tanh(h + b1_ref[...])                     # f32 accumulate + EUP tanh
    out = jnp.dot(h.astype(w2_ref.dtype), w2_ref[...],
                  preferred_element_type=jnp.float32)
    out = out + b2_ref[...]
    L = o_ref.shape[-1]
    o_ref[...] = out[:, :L].astype(o_ref.dtype)       # store only useful lanes


def _head_kernel_ktiled(x_ref, w1_ref, b1_ref, w2_ref, b2_ref, o_ref, acc_ref):
    # Hidden dim tiled into chunks of hk (grid axis 1, "arbitrary"):
    # x_ref: (tm, H)    w1_ref: (H, hk)   b1_ref: (1, hk)
    # w2_ref: (hk, Lp)  b2_ref: (1, Lp)   o_ref: (tm, L)   acc_ref: (tm, Lp) f32
    k = pl.program_id(1)
    x = x_ref[...].astype(w1_ref.dtype)
    h = jnp.dot(x, w1_ref[...], preferred_element_type=jnp.float32)
    h = jnp.tanh(h + b1_ref[...])
    part = jnp.dot(h.astype(w2_ref.dtype), w2_ref[...],
                   preferred_element_type=jnp.float32)

    @pl.when(k == 0)
    def _():
        acc_ref[...] = part + b2_ref[...]

    @pl.when(k > 0)
    def _():
        acc_ref[...] += part

    @pl.when(k == pl.num_programs(1) - 1)
    def _():
        L = o_ref.shape[-1]
        o_ref[...] = acc_ref[...][:, :L].astype(o_ref.dtype)


# --------------------------------------------------------------------------
# Helpers
# --------------------------------------------------------------------------
def _round_up(x, m):
    return (x + m - 1) // m * m


def _sublane_align(dtype):
    # f32 -> 8, bf16 -> 16, int8/fp8 -> 32 (sub-32-bit rows pack along sublanes)
    return max(8, 32 // jnp.dtype(dtype).itemsize)


def _vmem_budget():
    """~75% of physical VMEM (generation aware); conservative fallback (v7x 64 MiB)."""
    try:
        phys = int(pltpu.get_tpu_info().vmem_capacity_bytes)
    except Exception:
        phys = 64 << 20
    return (phys * 3) // 4


def _choose_hk(H, L_pad, w_item, vmem_budget, requested=None):
    """Hidden-dim chunk for K-tiling: a multiple of 128 that divides H exactly."""
    if H % 128 != 0:
        return None   # TODO(synk): handle non-128-multiple H with masked K chunks
    if requested is not None:
        hk = max(128, (int(requested) // 128) * 128)
    else:
        # double-buffered (H,hk)+(hk,L_pad) weight chunks <= ~1/4 of VMEM budget
        limit_rows = (vmem_budget // 4) // max(2 * (H + L_pad) * w_item, 1)
        hk = max(128, (min(H, limit_rows) // 128) * 128)
    hk = min(hk, H)
    while hk > 128 and H % hk != 0:
        hk -= 128
    if H % hk != 0:
        return None
    return hk


def _choose_tm(M, H, L, L_pad, x_dtype, o_dtype, *, vmem_budget,
               weight_resident_bytes, inter_h, ktiled, requested=None):
    """Row tile: byte-target sized, dtype-aligned, VMEM-capped, >=2 grid steps."""
    x_item = jnp.dtype(x_dtype).itemsize
    o_item = jnp.dtype(o_dtype).itemsize
    align = max(_sublane_align(x_dtype), _sublane_align(o_dtype))

    if requested is not None:
        target = int(requested)
    else:
        # ~2 MiB x tiles amortize the ~0.35 us fixed per-grid-step overhead.
        target = max(align, (2 << 20) // max(H * x_item, 1))

    per_row = (2 * H * x_item            # double-buffered x tile
               + 2 * L * o_item          # double-buffered out tile
               + (inter_h + L_pad) * 4)  # f32 hidden chunk + f32 pre-slice result
    if ktiled:
        per_row += L_pad * 4             # f32 accumulator scratch
    avail = vmem_budget - weight_resident_bytes - (2 << 20)
    cap = max(align, avail // per_row) if avail > 0 else align

    tm = min(target, cap)
    if M >= 2 * align:                   # ensure >=2 grid steps (v7x megacore)
        tm = min(tm, _round_up(-(-M // 2), align))
    tm = min(tm, _round_up(M, align))
    tm = max(align, (tm // align) * align)
    return tm


def prepare_head_params(w_dense, b_dense, w_out, b_out, *, compute_dtype=None):
    """One-time parameter prep (hoisted out of the per-call path).

    PyTorch layout in: w_dense [H, H], b_dense [H], w_out [L, H], b_out [L].
    Returns pre-transposed params; w_out is lane-padded to a multiple of 128 so
    the second matmul is lane-dense (the output itself is NOT padded).
    On v5e prefer compute_dtype=jnp.bfloat16 (f32 MXU is multi-pass there);
    accumulation stays f32 in-kernel either way.
    """
    w_dense = jnp.asarray(w_dense)
    w_out = jnp.asarray(w_out)
    H = w_dense.shape[0]
    L = w_out.shape[0]
    L_pad = max(128, _round_up(L, 128))

    w1 = w_dense.T                                             # [H, H]
    w2 = jnp.zeros((H, L_pad), dtype=w_out.dtype).at[:, :L].set(w_out.T)
    b1 = jnp.asarray(b_dense, dtype=jnp.float32).reshape(1, H)
    b2 = jnp.zeros((1, L_pad), dtype=jnp.float32).at[0, :L].set(
        jnp.asarray(b_out, dtype=jnp.float32))

    if compute_dtype is not None:
        w1 = w1.astype(compute_dtype)
        w2 = w2.astype(compute_dtype)

    return {"w1": w1, "b1": b1, "w2": w2, "b2": b2, "num_labels": int(L)}


# --------------------------------------------------------------------------
# Forward wrapper
# --------------------------------------------------------------------------
def model_head_forward(features, params, *, tm=None, hk=None):
    """features: [..., H]; params from prepare_head_params.

    Note: if params were prepared in bf16, features are cast to bf16 *inside*
    the kernel (f32 accumulation kept) — intended reduced-precision path.
    """
    w1, b1, w2, b2 = params["w1"], params["b1"], params["w2"], params["b2"]
    L = int(params["num_labels"])
    H = w1.shape[0]
    L_pad = w2.shape[1]

    orig_shape = features.shape
    assert orig_shape[-1] == H, (orig_shape, H)
    out_dtype = features.dtype

    x2d = features.reshape(-1, H)        # no pad: partial last block is masked
    M = x2d.shape[0]

    x_item = jnp.dtype(x2d.dtype).itemsize
    o_item = jnp.dtype(out_dtype).itemsize
    w_item = jnp.dtype(w1.dtype).itemsize

    vmem_budget = _vmem_budget()
    full_weight_bytes = (H * H + H * L_pad) * w_item + (H + L_pad) * 4
    # Budget as if weights were double-buffered, so the no-Buffered(1)
    # fallback path is still VMEM-safe.
    full_weight_resident = 2 * full_weight_bytes

    # K-tiling decision (large H, e.g. so v7x's 64 MiB VMEM is not exceeded).
    use_ktile = False
    hk_sel = H
    if hk is not None and 0 < int(hk) < H:
        cand = _choose_hk(H, L_pad, w_item, vmem_budget, requested=hk)
        if cand is not None and cand < H:
            hk_sel, use_ktile = cand, True
    elif full_weight_resident > vmem_budget // 3:
        cand = _choose_hk(H, L_pad, w_item, vmem_budget)
        if cand is not None and cand < H:
            hk_sel, use_ktile = cand, True

    if use_ktile:
        weight_resident = (2 * (H * hk_sel + hk_sel * L_pad) * w_item
                           + 2 * (hk_sel + L_pad) * 4)
    else:
        weight_resident = full_weight_resident

    tm = _choose_tm(M, H, L, L_pad, x2d.dtype, out_dtype,
                    vmem_budget=vmem_budget,
                    weight_resident_bytes=weight_resident,
                    inter_h=hk_sel, ktiled=use_ktile, requested=tm)
    grid_m = pl.cdiv(M, tm)

    per_row = (2 * H * x_item + 2 * L * o_item + (hk_sel + L_pad) * 4
               + (L_pad * 4 if use_ktile else 0))
    est = weight_resident + tm * per_row + (2 << 20)
    vmem_limit = int(min(vmem_budget, max(16 << 20, int(est * 1.25))))

    cost = pl.CostEstimate(
        flops=int(2 * M * H * H + 2 * M * H * L_pad),
        transcendentals=int(M * H),
        bytes_accessed=int(M * H * x_item + full_weight_bytes
                           + M * L * o_item),
    )

    out_shape = jax.ShapeDtypeStruct((M, L), out_dtype)

    if use_ktile:
        grid_k = H // hk_sel
        grid_spec = pltpu.PrefetchScalarGridSpec(
            num_scalar_prefetch=0,
            grid=(grid_m, grid_k),
            in_specs=[
                pl.BlockSpec((tm, H), lambda i, k: (i, 0)),        # x row tile
                pl.BlockSpec((H, hk_sel), lambda i, k: (0, k)),    # w1 chunk
                pl.BlockSpec((1, hk_sel), lambda i, k: (0, k)),    # b1 chunk
                pl.BlockSpec((hk_sel, L_pad), lambda i, k: (k, 0)),  # w2 chunk
                pl.BlockSpec((1, L_pad), lambda i, k: (0, 0)),     # b2
            ],
            out_specs=pl.BlockSpec((tm, L), lambda i, k: (i, 0)),  # exact-L out
            scratch_shapes=[pltpu.VMEM((tm, L_pad), jnp.float32)],
        )
        out2d = pl.pallas_call(
            _head_kernel_ktiled,
            out_shape=out_shape,
            grid_spec=grid_spec,
            compiler_params=pltpu.CompilerParams(
                dimension_semantics=("parallel", "arbitrary"),
                vmem_limit_bytes=vmem_limit),
            cost_estimate=cost,
        )(x2d, w1, b1, w2, b2)
    else:
        def _run(single_buffer_weights):
            wmode = {}
            if single_buffer_weights and hasattr(pl, "Buffered"):
                # Grid-invariant operands: don't spend VMEM on a second buffer.
                wmode = {"pipeline_mode": pl.Buffered(1)}
            grid_spec = pltpu.PrefetchScalarGridSpec(
                num_scalar_prefetch=0,
                grid=(grid_m,),
                in_specs=[
                    pl.BlockSpec((tm, H), lambda i: (i, 0)),           # x row tile
                    pl.BlockSpec((H, H), lambda i: (0, 0), **wmode),   # w1
                    pl.BlockSpec((1, H), lambda i: (0, 0), **wmode),   # b1
                    pl.BlockSpec((H, L_pad), lambda i: (0, 0), **wmode),  # w2
                    pl.BlockSpec((1, L_pad), lambda i: (0, 0), **wmode),  # b2
                ],
                out_specs=pl.BlockSpec((tm, L), lambda i: (i, 0)),     # exact-L out
            )
            return pl.pallas_call(
                _head_kernel,
                out_shape=out_shape,
                grid_spec=grid_spec,
                compiler_params=pltpu.CompilerParams(
                    dimension_semantics=("parallel",),
                    vmem_limit_bytes=vmem_limit),
                cost_estimate=cost,
            )(x2d, w1, b1, w2, b2)

        try:
            out2d = _run(True)
        except Exception:
            # Fallback if this jax build rejects pipeline_mode=Buffered(1).
            # VMEM budget above already reserves double-buffered weights.
            out2d = _run(False)

    return out2d.reshape(*orig_shape[:-1], L)


# --------------------------------------------------------------------------
# Reference + tests
# --------------------------------------------------------------------------
def _reference(features, w_dense, b_dense, w_out, b_out):
    h = jnp.tanh(features @ w_dense.T + b_dense)
    return h @ w_out.T + b_out


if __name__ == "__main__":
    # Shapes consistent with the module: hidden_size=32, num_labels=6.
    H, L = 32, 6
    key = jax.random.PRNGKey(0)
    k_x, k_w1, k_b1, k_w2, k_b2, k_x2, k_big = jax.random.split(key, 7)

    # PyTorch layout: weight [out, in].
    w_dense = jax.random.normal(k_w1, (H, H), dtype=jnp.float32) * 0.1
    b_dense = jax.random.normal(k_b1, (H,), dtype=jnp.float32) * 0.1
    w_out = jax.random.normal(k_w2, (L, H), dtype=jnp.float32) * 0.1
    b_out = jax.random.normal(k_b2, (L,), dtype=jnp.float32) * 0.1

    params_f32 = prepare_head_params(w_dense, b_dense, w_out, b_out)

    # Dropout is identity at inference time (no-op here).

    # Test 1: [B, S, H] = [2, 8, 32], f32, auto tile (2 grid steps via megacore cap).
    B, S = 2, 8
    features = jax.random.normal(k_x, (B, S, H), dtype=jnp.float32)
    out = jax.block_until_ready(model_head_forward(features, params_f32))
    ref = _reference(features, w_dense, b_dense, w_out, b_out)
    assert out.shape == (B, S, L), out.shape
    assert jnp.allclose(out, ref, atol=1e-5, rtol=1e-5), \
        float(jnp.max(jnp.abs(out - ref)))

    # Test 2: ragged row count (M=150, not a tile multiple) + explicit small
    # tile so the grid has several pipelined steps with a partial last block.
    B2, S2 = 3, 50
    features2 = jax.random.normal(k_x2, (B2, S2, H), dtype=jnp.float32)
    out2 = jax.block_until_ready(model_head_forward(features2, params_f32, tm=64))
    ref2 = _reference(features2, w_dense, b_dense, w_out, b_out)
    assert out2.shape == (B2, S2, L), out2.shape
    assert jnp.allclose(out2, ref2, atol=1e-5, rtol=1e-5), \
        float(jnp.max(jnp.abs(out2 - ref2)))

    # Test 3: bf16 weights (recommended on v5e); x cast to bf16 in-kernel,
    # f32 accumulation; loose tolerance vs the f32 reference.
    params_bf16 = prepare_head_params(w_dense, b_dense, w_out, b_out,
                                      compute_dtype=jnp.bfloat16)
    out_bf16 = jax.block_until_ready(model_head_forward(features, params_bf16))
    assert out_bf16.shape == (B, S, L), out_bf16.shape
    assert jnp.allclose(out_bf16, ref, atol=5e-2, rtol=5e-2), \
        float(jnp.max(jnp.abs(out_bf16 - ref)))

    # Test 4: K-tiled hidden dim (forced hk=128 with H=256) exercising the
    # accumulator / pl.when path used when weights would not fit v7x VMEM.
    H2, L2 = 256, 10
    kk = jax.random.split(k_big, 5)
    w_dense2 = jax.random.normal(kk[0], (H2, H2), dtype=jnp.float32) * 0.05
    b_dense2 = jax.random.normal(kk[1], (H2,), dtype=jnp.float32) * 0.05
    w_out2 = jax.random.normal(kk[2], (L2, H2), dtype=jnp.float32) * 0.05
    b_out2 = jax.random.normal(kk[3], (L2,), dtype=jnp.float32) * 0.05
    params_big = prepare_head_params(w_dense2, b_dense2, w_out2, b_out2)
    features3 = jax.random.normal(kk[4], (2, 16, H2), dtype=jnp.float32)
    out3 = jax.block_until_ready(model_head_forward(features3, params_big, hk=128))
    ref3 = _reference(features3, w_dense2, b_dense2, w_out2, b_out2)
    assert out3.shape == (2, 16, L2), out3.shape
    assert jnp.allclose(out3, ref3, atol=1e-4, rtol=1e-4), \
        float(jnp.max(jnp.abs(out3 - ref3)))

    print("KERNEL_OK")
</pallas_src>

<mosaic_0001>
module attributes {stable_mosaic.version = 11 : i64} {
  func.func @_head_kernel(%arg0: i32, %arg1: memref<8x32xf32, #tpu.memory_space<vmem>>, %arg2: memref<32x32xf32, #tpu.memory_space<vmem>>, %arg3: memref<1x32xf32, #tpu.memory_space<vmem>>, %arg4: memref<32x128xf32, #tpu.memory_space<vmem>>, %arg5: memref<1x128xf32, #tpu.memory_space<vmem>>, %arg6: memref<8x6xf32, #tpu.memory_space<vmem>>) attributes {dimension_semantics = [#tpu.dimension_semantics<parallel>], iteration_bounds = array<i64: 2>, scalar_prefetch = 0 : i64, scratch_operands = 0 : i64, tpu.core_type = #tpu.core_type<tc>, window_params = [{transform_indices = @transform_0, window_bounds = array<i64: 8, 32>}, {pipeline_mode = #tpu.pipeline_mode<synchronous>, transform_indices = @transform_1, window_bounds = array<i64: 32, 32>}, {pipeline_mode = #tpu.pipeline_mode<synchronous>, transform_indices = @transform_2, window_bounds = array<i64: 1, 32>}, {pipeline_mode = #tpu.pipeline_mode<synchronous>, transform_indices = @transform_3, window_bounds = array<i64: 32, 128>}, {pipeline_mode = #tpu.pipeline_mode<synchronous>, transform_indices = @transform_4, window_bounds = array<i64: 1, 128>}, {transform_indices = @transform_5, window_bounds = array<i64: 8, 6>}]} {
    %c0 = arith.constant 0 : index
    %c0_0 = arith.constant 0 : index
    %0 = vector.load %arg1[%c0, %c0_0] : memref<8x32xf32, #tpu.memory_space<vmem>>, vector<8x32xf32>
    %c0_1 = arith.constant 0 : index
    %c0_2 = arith.constant 0 : index
    %1 = vector.load %arg2[%c0_1, %c0_2] : memref<32x32xf32, #tpu.memory_space<vmem>>, vector<32x32xf32>
    %cst = arith.constant dense<0.000000e+00> : vector<8x32xf32>
    %2 = tpu.matmul %0, %1, %cst {dimension_numbers = #tpu.dot_dimension_numbers<[1], [0], [0], [1], [0, 0, 1, 1], [], []>} : vector<8x32xf32>, vector<32x32xf32>, vector<8x32xf32> -> vector<8x32xf32>
    %c0_3 = arith.constant 0 : index
    %c0_4 = arith.constant 0 : index
    %3 = vector.load %arg3[%c0_3, %c0_4] : memref<1x32xf32, #tpu.memory_space<vmem>>, vector<1x32xf32>
    %4 = vector.broadcast %3 : vector<1x32xf32> to vector<8x32xf32>
    %5 = arith.addf %2, %4 : vector<8x32xf32>
    %6 = math.tanh %5 : vector<8x32xf32>
    %c0_5 = arith.constant 0 : index
    %c0_6 = arith.constant 0 : index
    %7 = vector.load %arg4[%c0_5, %c0_6] : memref<32x128xf32, #tpu.memory_space<vmem>>, vector<32x128xf32>
    %cst_7 = arith.constant dense<0.000000e+00> : vector<8x128xf32>
    %8 = tpu.matmul %6, %7, %cst_7 {dimension_numbers = #tpu.dot_dimension_numbers<[1], [0], [0], [1], [0, 0, 1, 1], [], []>} : vector<8x32xf32>, vector<32x128xf32>, vector<8x128xf32> -> vector<8x128xf32>
    %c0_8 = arith.constant 0 : index
    %c0_9 = arith.constant 0 : index
    %9 = vector.load %arg5[%c0_8, %c0_9] : memref<1x128xf32, #tpu.memory_space<vmem>>, vector<1x128xf32>
    %10 = vector.broadcast %9 : vector<1x128xf32> to vector<8x128xf32>
    %11 = arith.addf %8, %10 : vector<8x128xf32>
    %12 = vector.extract_strided_slice %11 {offsets = [0, 0], sizes = [8, 6], strides = [1, 1]} : vector<8x128xf32> to vector<8x6xf32>
    %c0_10 = arith.constant 0 : index
    %c0_11 = arith.constant 0 : index
    %13 = vector.load %arg6[%c0_10, %c0_11] : memref<8x6xf32, #tpu.memory_space<vmem>>, vector<8x6xf32>
    tpu.vector_store %arg6[%c0_10, %c0_11], %12 {strides = array<i32>} : memref<8x6xf32, #tpu.memory_space<vmem>>, vector<8x6xf32>,
    return
  }
  func.func @transform_0(%arg0: i32) -> (i32, i32) {
    %c0_i32 = arith.constant 0 : i32
    %c0_i32_0 = arith.constant 0 : i32
    return %arg0, %c0_i32 : i32, i32
  }
  func.func @transform_1(%arg0: i32) -> (i32, i32) {
    %c0_i32 = arith.constant 0 : i32
    %c0_i32_0 = arith.constant 0 : i32
    %c0_i32_1 = arith.constant 0 : i32
    return %c0_i32, %c0_i32_0 : i32, i32
  }
  func.func @transform_2(%arg0: i32) -> (i32, i32) {
    %c0_i32 = arith.constant 0 : i32
    %c0_i32_0 = arith.constant 0 : i32
    %c0_i32_1 = arith.constant 0 : i32
    return %c0_i32, %c0_i32_0 : i32, i32
  }
  func.func @transform_3(%arg0: i32) -> (i32, i32) {
    %c0_i32 = arith.constant 0 : i32
    %c0_i32_0 = arith.constant 0 : i32
    %c0_i32_1 = arith.constant 0 : i32
    return %c0_i32, %c0_i32_0 : i32, i32
  }
  func.func @transform_4(%arg0: i32) -> (i32, i32) {
    %c0_i32 = arith.constant 0 : i32
    %c0_i32_0 = arith.constant 0 : i32
    %c0_i32_1 = arith.constant 0 : i32
    return %c0_i32, %c0_i32_0 : i32, i32
  }
  func.func @transform_5(%arg0: i32) -> (i32, i32) {
    %c0_i32 = arith.constant 0 : i32
    %c0_i32_0 = arith.constant 0 : i32
    return %arg0, %c0_i32 : i32, i32
  }
}

module attributes {stable_mosaic.version = 11 : i64} {
  func.func @_head_kernel(%arg0: i32, %arg1: memref<8x32xf32, #tpu.memory_space<vmem>>, %arg2: memref<32x32xf32, #tpu.memory_space<vmem>>, %arg3: memref<1x32xf32, #tpu.memory_space<vmem>>, %arg4: memref<32x128xf32, #tpu.memory_space<vmem>>, %arg5: memref<1x128xf32, #tpu.memory_space<vmem>>, %arg6: memref<8x6xf32, #tpu.memory_space<vmem>>) attributes {dimension_semantics = [#tpu.dimension_semantics<parallel>], iteration_bounds = array<i64: 2>, scalar_prefetch = 0 : i64, scratch_operands = 0 : i64, tpu.core_type = #tpu.core_type<tc>, window_params = [{transform_indices = @transform_0, window_bounds = array<i64: 8, 32>}, {pipeline_mode = #tpu.pipeline_mode<synchronous>, transform_indices = @transform_1, window_bounds = array<i64: 32, 32>}, {pipeline_mode = #tpu.pipeline_mode<synchronous>, transform_indices = @transform_2, window_bounds = array<i64: 1, 32>}, {pipeline_mode = #tpu.pipeline_mode<synchronous>, transform_indices = @transform_3, window_bounds = array<i64: 32, 128>}, {pipeline_mode = #tpu.pipeline_mode<synchronous>, transform_indices = @transform_4, window_bounds = array<i64: 1, 128>}, {transform_indices = @transform_5, window_bounds = array<i64: 8, 6>}]} {
    %c0 = arith.constant 0 : index
    %c0_0 = arith.constant 0 : index
    %0 = vector.load %arg1[%c0, %c0_0] : memref<8x32xf32, #tpu.memory_space<vmem>>, vector<8x32xf32>
    %c0_1 = arith.constant 0 : index
    %c0_2 = arith.constant 0 : index
    %1 = vector.load %arg2[%c0_1, %c0_2] : memref<32x32xf32, #tpu.memory_space<vmem>>, vector<32x32xf32>
    %cst = arith.constant dense<0.000000e+00> : vector<8x32xf32>
    %2 = tpu.matmul %0, %1, %cst {dimension_numbers = #tpu.dot_dimension_numbers<[1], [0], [0], [1], [0, 0, 1, 1], [], []>} : vector<8x32xf32>, vector<32x32xf32>, vector<8x32xf32> -> vector<8x32xf32>
    %c0_3 = arith.constant 0 : index
    %c0_4 = arith.constant 0 : index
    %3 = vector.load %arg3[%c0_3, %c0_4] : memref<1x32xf32, #tpu.memory_space<vmem>>, vector<1x32xf32>
    %4 = vector.broadcast %3 : vector<1x32xf32> to vector<8x32xf32>
    %5 = arith.addf %2, %4 : vector<8x32xf32>
    %6 = math.tanh %5 : vector<8x32xf32>
    %c0_5 = arith.constant 0 : index
    %c0_6 = arith.constant 0 : index
    %7 = vector.load %arg4[%c0_5, %c0_6] : memref<32x128xf32, #tpu.memory_space<vmem>>, vector<32x128xf32>
    %cst_7 = arith.constant dense<0.000000e+00> : vector<8x128xf32>
    %8 = tpu.matmul %6, %7, %cst_7 {dimension_numbers = #tpu.dot_dimension_numbers<[1], [0], [0], [1], [0, 0, 1, 1], [], []>} : vector<8x32xf32>, vector<32x128xf32>, vector<8x128xf32> -> vector<8x128xf32>
    %c0_8 = arith.constant 0 : index
    %c0_9 = arith.constant 0 : index
    %9 = vector.load %arg5[%c0_8, %c0_9] : memref<1x128xf32, #tpu.memory_space<vmem>>, vector<1x128xf32>
    %10 = vector.broadcast %9 : vector<1x128xf32> to vector<8x128xf32>
    %11 = arith.addf %8, %10 : vector<8x128xf32>
    %12 = vector.extract_strided_slice %11 {offsets = [0, 0], sizes = [8, 6], strides = [1, 1]} : vector<8x128xf32> to vector<8x6xf32>
    %c0_10 = arith.constant 0 : index
    %c0_11 = arith.constant 0 : index
    %13 = vector.load %arg6[%c0_10, %c0_11] : memref<8x6xf32, #tpu.memory_space<vmem>>, vector<8x6xf32>
    tpu.vector_store %arg6[%c0_10, %c0_11], %12 {strides = array<i32>} : memref<8x6xf32, #tpu.memory_space<vmem>>, vector<8x6xf32>,
    return
  }
  func.func @transform_0(%arg0: i32) -> (i32, i32) {
    %c0_i32 = arith.constant 0 : i32
    %c0_i32_0 = arith.constant 0 : i32
    return %arg0, %c0_i32 : i32, i32
  }
  func.func @transform_1(%arg0: i32) -> (i32, i32) {
    %c0_i32 = arith.constant 0 : i32
    %c0_i32_0 = arith.constant 0 : i32
    %c0_i32_1 = arith.constant 0 : i32
    return %c0_i32, %c0_i32_0 : i32, i32
  }
  func.func @transform_2(%arg0: i32) -> (i32, i32) {
    %c0_i32 = arith.constant 0 : i32
    %c0_i32_0 = arith.constant 0 : i32
    %c0_i32_1 = arith.constant 0 : i32
    return %c0_i32, %c0_i32_0 : i32, i32
  }
  func.func @transform_3(%arg0: i32) -> (i32, i32) {
    %c0_i32 = arith.constant 0 : i32
    %c0_i32_0 = arith.constant 0 : i32
    %c0_i32_1 = arith.constant 0 : i32
    return %c0_i32, %c0_i32_0 : i32, i32
  }
  func.func @transform_4(%arg0: i32) -> (i32, i32) {
    %c0_i32 = arith.constant 0 : i32
    %c0_i32_0 = arith.constant 0 : i32
    %c0_i32_1 = arith.constant 0 : i32
    return %c0_i32, %c0_i32_0 : i32, i32
  }
  func.func @transform_5(%arg0: i32) -> (i32, i32) {
    %c0_i32 = arith.constant 0 : i32
    %c0_i32_0 = arith.constant 0 : i32
    return %arg0, %c0_i32 : i32, i32
  }
}

</mosaic_0001>

<llo_original>
// kernel: tpu_custom_call.1
$region0: #{tpu_custom_call.1}
  #allocation0 [shape = 'u32[]', space=smem, size = 0x4, offset = 0x4, fixed_abs, tag = 'smem constant byte address 0x4 - core index']
  #allocation1 [shape = 'u32[144,128]{1,0:T(1,128)}', space=vmem, size = 0x12000, scoped, tag = 'internal scratch']
  %s0 = inlined_call_operand.hbm [shape: f32[16,32], index: 0, kind: input, shape index: {}]
  %s1 = inlined_call_operand.hbm [shape: f32[32,32], index: 1, kind: input, shape index: {}]
  %s2 = inlined_call_operand.vmem [shape: f32[1,32], index: 2, kind: input, shape index: {}]
  %s3 = inlined_call_operand.hbm [shape: f32[32,128], index: 3, kind: input, shape index: {}]
  %s4 = inlined_call_operand.vmem [shape: f32[1,128], index: 4, kind: input, shape index: {}]
  %s5 = inlined_call_operand.vmem [shape: f32[16,6], index: 5, kind: output, shape index: {}]
  %s6 = sld [smem:[#allocation0]]
  $region65: #{tpu_custom_call.1} parent=0
    _
  %s8 = ssub.s32 1, %s6
  %s9 = scalar_select 0, %s8, %s6
  $region1: #{tpu_custom_call.1} parent=0
    #allocation2 [shape = 'u8[8192]{0}', space=vmem, size = 0x2000, scoped, tag = 'input window, operand 0']
    #allocation3 [shape = 's32[2]{0}', space=sflag, size = 0x8, scoped, tag = 'scoped memory for tpu_custom_call.1']
    #allocation4 [shape = 'u8[16384]{0}', space=vmem, size = 0x4000, scoped, tag = 'input window, operand 1, single buffered']
    #allocation5 [shape = 's32[1]{0}', space=sflag, size = 0x4, scoped, tag = 'scoped memory for tpu_custom_call.1']
    #allocation6 [shape = 'u8[16384]{0}', space=vmem, size = 0x4000, scoped, tag = 'input window, operand 3, single buffered']
    %10 = vsyncpa [#allocation3], 0
    %s11 = scalar_lea.sflag [#allocation3], 1
    %12 = vsyncpa %s11, 0
    %13 = vsyncpa [#allocation5], 0
    loop: start=0, step=1, limit=4
    $region2: #{tpu_custom_call.1} parent=1 // loop_pre_header
      _
    $region3: #{tpu_custom_call.1} parent=1 // loop_header
      %s15 = sphi 0, %s19
      %p16 = scmp.ge.s32.totalorder %s15, 4
      %s25 = sphi 0, %s27
      %s28 = sphi 0, %s25
      %s29 = sphi 0, %s28
      %s45 = sphi 0, %s29
      %s49 = sphi 0, %s49
      %s51 = sphi 0, %s49
      %s52 = sphi 0, %s51
      %s66 = sphi 0, %s52
      %s70 = sphi 0, %s70
      %s72 = sphi 0, %s70
      %s73 = sphi 0, %s72
      %s87 = sphi 0, %s73
      %s91 = sphi 0, %s91
      %s93 = sphi 0, %s91
      %s94 = sphi 0, %s93
      %s108 = sphi 0, %s94
      %s112 = sphi 0, %s112
      %s114 = sphi 0, %s112
      %s115 = sphi 0, %s114
      %s129 = sphi 0, %s115
      %s135 = sphi 0, %s137
      %s138 = sphi 0, %s135
      %s139 = sphi 0, %s138
      %s155 = sphi 0, %s139
    $region4: #{tpu_custom_call.1} parent=1 // loop_header_branch
      %18 = sbr.rel (%p16) target = $region8
    $region5: #{tpu_custom_call.1} parent=1 // loop_body
      %s20 = ssub.s32 %s15, 1
      %s21 = ssub.s32 %s15, 2
      %s22 = sadd.s32 %s15, 1
      %s23 = ssub.s32 %s15, %s22
      %p24 = scmp.eq.s32.totalorder %s23, 0
      %s26 = sadd.s32 %s25, 1
      %s27 = scalar_select %p24, %s25, %s26
      %p30 = pneg %p24
      %p31 = scmp.eq.s32.totalorder %s15, 1
      %p32 = por %p30, %p31
      %p33 = scmp.ne.s32.totalorder %s25, %s28
      %p34 = scmp.eq.s32.totalorder %s15, 0
      %p35 = por %p33, %p34
      %p36 = scmp.ne.s32.totalorder %s25, %s28
      %p37 = scmp.eq.s32.totalorder %s20, 1
      %p38 = por %p36, %p37
      %p39 = scmp.ne.s32.totalorder %s28, %s29
      %p40 = scmp.eq.s32.totalorder %s20, 0
      %p41 = por %p39, %p40
      %p42 = scmp.ne.s32.totalorder %s28, %s29
      %p43 = scmp.eq.s32.totalorder %s21, 1
      %p44 = por %p42, %p43
      %p46 = scmp.ne.s32.totalorder %s29, %s45
      %p47 = scmp.eq.s32.totalorder %s21, 0
      %p48 = por %p46, %p47
      %s50 = sadd.s32 %s49, 1
      %p53 = scmp.eq.s32.totalorder %s15, 1
      %p54 = scmp.ne.s32.totalorder %s49, %s51
      %p55 = scmp.eq.s32.totalorder %s15, 0
      %p56 = por %p54, %p55
      %p57 = scmp.ne.s32.totalorder %s49, %s51
      %p58 = scmp.eq.s32.totalorder %s20, 1
      %p59 = por %p57, %p58
      %p60 = scmp.ne.s32.totalorder %s51, %s52
      %p61 = scmp.eq.s32.totalorder %s20, 0
      %p62 = por %p60, %p61
      %p63 = scmp.ne.s32.totalorder %s51, %s52
      %p64 = scmp.eq.s32.totalorder %s21, 1
      %p65 = por %p63, %p64
      %p67 = scmp.ne.s32.totalorder %s52, %s66
      %p68 = scmp.eq.s32.totalorder %s21, 0
      %p69 = por %p67, %p68
      %s71 = sadd.s32 %s70, 1
      %p74 = scmp.eq.s32.totalorder %s15, 1
      %p75 = scmp.ne.s32.totalorder %s70, %s72
      %p76 = scmp.eq.s32.totalorder %s15, 0
      %p77 = por %p75, %p76
      %p78 = scmp.ne.s32.totalorder %s70, %s72
      %p79 = scmp.eq.s32.totalorder %s20, 1
      %p80 = por %p78, %p79
      %p81 = scmp.ne.s32.totalorder %s72, %s73
      %p82 = scmp.eq.s32.totalorder %s20, 0
      %p83 = por %p81, %p82
      %p84 = scmp.ne.s32.totalorder %s72, %s73
      %p85 = scmp.eq.s32.totalorder %s21, 1
      %p86 = por %p84, %p85
      %p88 = scmp.ne.s32.totalorder %s73, %s87
      %p89 = scmp.eq.s32.totalorder %s21, 0
      %p90 = por %p88, %p89
      %s92 = sadd.s32 %s91, 1
      %p95 = scmp.eq.s32.totalorder %s15, 1
      %p96 = scmp.ne.s32.totalorder %s91, %s93
      %p97 = scmp.eq.s32.totalorder %s15, 0
      %p98 = por %p96, %p97
      %p99 = scmp.ne.s32.totalorder %s91, %s93
      %p100 = scmp.eq.s32.totalorder %s20, 1
      %p101 = por %p99, %p100
      %p102 = scmp.ne.s32.totalorder %s93, %s94
      %p103 = scmp.eq.s32.totalorder %s20, 0
      %p104 = por %p102, %p103
      %p105 = scmp.ne.s32.totalorder %s93, %s94
      %p106 = scmp.eq.s32.totalorder %s21, 1
      %p107 = por %p105, %p106
      %p109 = scmp.ne.s32.totalorder %s94, %s108
      %p110 = scmp.eq.s32.totalorder %s21, 0
      %p111 = por %p109, %p110
      %s113 = sadd.s32 %s112, 1
      %p116 = scmp.eq.s32.totalorder %s15, 1
      %p117 = scmp.ne.s32.totalorder %s112, %s114
      %p118 = scmp.eq.s32.totalorder %s15, 0
      %p119 = por %p117, %p118
      %p120 = scmp.ne.s32.totalorder %s112, %s114
      %p121 = scmp.eq.s32.totalorder %s20, 1
      %p122 = por %p120, %p121
      %p123 = scmp.ne.s32.totalorder %s114, %s115
      %p124 = scmp.eq.s32.totalorder %s20, 0
      %p125 = por %p123, %p124
      %p126 = scmp.ne.s32.totalorder %s114, %s115
      %p127 = scmp.eq.s32.totalorder %s21, 1
      %p128 = por %p126, %p127
      %p130 = scmp.ne.s32.totalorder %s115, %s129
      %p131 = scmp.eq.s32.totalorder %s21, 0
      %p132 = por %p130, %p131
      %s133 = ssub.s32 %s15, %s22
      %p134 = scmp.eq.s32.totalorder %s133, 0
      %s136 = sadd.s32 %s135, 1
      %s137 = scalar_select %p134, %s135, %s136
      %p140 = pneg %p134
      %p141 = scmp.eq.s32.totalorder %s15, 1
      %p142 = por %p140, %p141
      %p143 = scmp.ne.s32.totalorder %s135, %s138
      %p144 = scmp.eq.s32.totalorder %s15, 0
      %p145 = por %p143, %p144
      %p146 = scmp.ne.s32.totalorder %s135, %s138
      %p147 = scmp.eq.s32.totalorder %s20, 1
      %p148 = por %p146, %p147
      %p149 = scmp.ne.s32.totalorder %s138, %s139
      %p150 = scmp.eq.s32.totalorder %s20, 0
      %p151 = por %p149, %p150
      %p152 = scmp.ne.s32.totalorder %s138, %s139
      %p153 = scmp.eq.s32.totalorder %s21, 1
      %p154 = por %p152, %p153
      %p156 = scmp.ne.s32.totalorder %s139, %s155
      %p157 = scmp.eq.s32.totalorder %s21, 0
      %p158 = por %p156, %p157
      %p159 = scmp.le.s32.totalorder 1, %s15
      %p160 = scmp.lt.s32.totalorder %s15, 3
      %p161 = pnand %p159, %p160
      %p162 = pneg %p161
      // Predicated region
      $region9: #{tpu_custom_call.1} parent=5 // pred_check
        _
      $region10: #{tpu_custom_call.1} parent=5 // pred_check_branch
        %164 = sbr.rel (%p161) target = $region12
      $region11: #{tpu_custom_call.1} parent=5 // pred_region
        %s165 = ssub.s32 %s15, 1
        // Predicated region
        $region13: #{tpu_custom_call.1} parent=11 // pred_check
          %p166 = pneg %p62
        $region14: #{tpu_custom_call.1} parent=11 // pred_check_branch
          %168 = sbr.rel (%p166) target = $region16
        $region15: #{tpu_custom_call.1} parent=11 // pred_region
          %s170 = ssub.s32 512, 512
          %171 = vsyncadd [#allocation5], %s170
          %s172 = sshll.u32 [#allocation4], 4
          %s173 = int_to_ptr.vmem [resolvable:$true] %s172
          %178 = dma.hbm_to_vmem [thread:$0]  %s1, 512, %s173, [#allocation5], 128, 128, 8
        $region16: #{tpu_custom_call.1} parent=11 // pred_fallthru
          _
        // Predicated region
        $region17: #{tpu_custom_call.1} parent=11 // pred_check
          %p179 = pneg %p83
        $region18: #{tpu_custom_call.1} parent=11 // pred_check_branch
          %181 = sbr.rel (%p179) target = $region20
        $region19: #{tpu_custom_call.1} parent=11 // pred_region
          _
        $region20: #{tpu_custom_call.1} parent=11 // pred_fallthru
          _
        // Predicated region
        $region21: #{tpu_custom_call.1} parent=11 // pred_check
          %p182 = pneg %p104
        $region22: #{tpu_custom_call.1} parent=11 // pred_check_branch
          %184 = sbr.rel (%p182) target = $region24
        $region23: #{tpu_custom_call.1} parent=11 // pred_region
          %s186 = ssub.s32 512, 512
          %187 = vsyncadd [#allocation5], %s186
          %s188 = sshll.u32 [#allocation6], 4
          %s189 = int_to_ptr.vmem [resolvable:$true] %s188
          %194 = dma.hbm_to_vmem [thread:$0]  %s3, 512, %s189, [#allocation5], 128, 128, 8
        $region24: #{tpu_custom_call.1} parent=11 // pred_fallthru
          _
        // Predicated region
        $region25: #{tpu_custom_call.1} parent=11 // pred_check
          %p195 = pneg %p125
        $region26: #{tpu_custom_call.1} parent=11 // pred_check_branch
          %197 = sbr.rel (%p195) target = $region28
        $region27: #{tpu_custom_call.1} parent=11 // pred_region
          _
        $region28: #{tpu_custom_call.1} parent=11 // pred_fallthru
          _
      $region12: #{tpu_custom_call.1} parent=5 // pred_fallthru
        _
      %p198 = scmp.lt.s32.totalorder %s15, 2
      // Predicated region
      $region29: #{tpu_custom_call.1} parent=5 // pred_check
        %p199 = pneg %p198
      $region30: #{tpu_custom_call.1} parent=5 // pred_check_branch
        %201 = sbr.rel (%p199) target = $region32
      $region31: #{tpu_custom_call.1} parent=5 // pred_region
        // Predicated region
        $region33: #{tpu_custom_call.1} parent=31 // pred_check
          %p202 = pneg %p35
        $region34: #{tpu_custom_call.1} parent=31 // pred_check_branch
          %204 = sbr.rel (%p202) target = $region36
        $region35: #{tpu_custom_call.1} parent=31 // pred_region
          %s205 = sand.u32 %s25, 1
          %s206 = scalar_lea.sflag [#allocation3], %s205
          %s207 = sand.u32 %s25, 1
          %s208 = smul.addr %s207, 8
          %s209 = scalar_lea.vmem [#allocation2], %s208
          %s211 = ssub.s32 128, 128
          %212 = vsyncadd %s206, %s211
          %s213 = smul.addr %s15, 128
          %s214 = scalar_lea.hbm %s0, %s213
          %s216 = sshll.u32 %s209, 4
          %s217 = int_to_ptr.vmem [resolvable:$true] %s216
          %219 = dma.hbm_to_vmem [thread:$0]  %s214, 128, %s217, %s206
        $region36: #{tpu_custom_call.1} parent=31 // pred_fallthru
          _
      $region32: #{tpu_custom_call.1} parent=5 // pred_fallthru
        _
      %p220 = scmp.le.s32.totalorder 1, %s15
      %p221 = scmp.lt.s32.totalorder %s15, 3
      %p222 = pnand %p220, %p221
      %p223 = pneg %p222
      // Predicated region
      $region37: #{tpu_custom_call.1} parent=5 // pred_check
        _
      $region38: #{tpu_custom_call.1} parent=5 // pred_check_branch
        %225 = sbr.rel (%p222) target = $region40
      $region39: #{tpu_custom_call.1} parent=5 // pred_region
        %s226 = ssub.s32 %s15, 1
        %s227 = sand.u32 %s28, 1
        %s228 = scalar_lea.sflag [#allocation3], %s227
        %s229 = sand.u32 %s28, 1
        %s230 = smul.addr %s229, 8
        %s231 = scalar_lea.vmem [#allocation2], %s230
        // Predicated region
        $region41: #{tpu_custom_call.1} parent=39 // pred_check
          %p232 = pneg %p41
        $region42: #{tpu_custom_call.1} parent=39 // pred_check_branch
          %234 = sbr.rel (%p232) target = $region44
        $region43: #{tpu_custom_call.1} parent=39 // pred_region
          %235 = dma.done %s228, 128
        $region44: #{tpu_custom_call.1} parent=39 // pred_fallthru
          _
        // Predicated region
        $region45: #{tpu_custom_call.1} parent=39 // pred_check
          %p236 = pneg %p62
        $region46: #{tpu_custom_call.1} parent=39 // pred_check_branch
          %238 = sbr.rel (%p236) target = $region48
        $region47: #{tpu_custom_call.1} parent=39 // pred_region
          %239 = dma.done [#allocation5], 512
        $region48: #{tpu_custom_call.1} parent=39 // pred_fallthru
          _
        // Predicated region
        $region49: #{tpu_custom_call.1} parent=39 // pred_check
          %p240 = pneg %p104
        $region50: #{tpu_custom_call.1} parent=39 // pred_check_branch
          %242 = sbr.rel (%p240) target = $region52
        $region51: #{tpu_custom_call.1} parent=39 // pred_region
          %243 = dma.done [#allocation5], 512
        $region52: #{tpu_custom_call.1} parent=39 // pred_fallthru
          _
        %s244 = sand.u32 %s28, 1
        %s245 = scalar_lea.sflag [#allocation3], %s244
        %s246 = sand.u32 %s28, 1
        %s247 = smul.addr %s246, 8
        %s248 = scalar_lea.vmem [#allocation2], %s247
        %p249 = pneg %p41
        %p250 = pneg %p38
        %p251 = pneg %p62
        %p252 = pneg %p59
        %p253 = pneg %p83
        %p254 = pneg %p80
        %p255 = pneg %p104
        %p256 = pneg %p101
        %p257 = pneg %p125
        %p258 = pneg %p122
        %p259 = pneg %p151
        %p260 = pneg %p148
        %p261 = scmp.lt.s32.totalorder %s20, 1
        %s262 = scalar_select %p261, %s20, 1
        %s263 = smul.addr %s262, 8
        %s264 = scalar_lea.vmem %s5, %s263
        %p265 = scmp.lt.s32.totalorder %s20, 1
        %s266 = scalar_select %p265, %s20, 1
        %s267 = smul.addr %s266, 8
        %s268 = scalar_lea.vmem %s5, %s267
        %v269 = vld [vmem:[%s231] sm:$0xff]
        %v270 = vld [vmem:[#allocation4] sm:$0xff]
        %v271 = vld [vmem:[#allocation4 + $0x8] sm:$0xff]
        %v272 = vld [vmem:[#allocation4 + $0x10] sm:$0xff]
        %v273 = vld [vmem:[#allocation4 + $0x18] sm:$0xff]
        %v274 = vld [vmem:[%s2] sm:$0x1]
        %v276 = vlaneseq
        %v277 = vshrl.u32 %v276, 7
        %v278 = vsub.s32 0, %v277
        %v279 = vrot.slane %v274, %v278
        %vm281 = vcmask 261120
        %v283 = vsel %vm281, %v269, 0
        %285 = vmatprep.subr.mxu0 0.0
        %286 = vmatpush1.msra.mxu0 0.0
        %287 = vmatprep.subr.mxu0 0.0
        %288 = vmatpush1.msra.mxu0 0.0
        %289 = vmatprep.subr.mxu0 0.0
        %290 = vmatpush1.msra.mxu0 0.0
        %291 = vmatprep.subr.mxu0 0.0
        %292 = vmatpush1.msra.mxu0 0.0
        %293 = vmatprep.subr.mxu0 0.0
        %294 = vmatpush1.msra.mxu0 0.0
        %295 = vmatprep.subr.mxu0 0.0
        %296 = vmatpush1.msra.mxu0 0.0
        %297 = vmatprep.subr.mxu0 0.0
        %298 = vmatpush1.msra.mxu0 0.0
        %299 = vmatprep.subr.mxu0 0.0
        %300 = vmatpush1.msra.mxu0 0.0
        %301 = vmatprep.subr.mxu0 0.0
        %302 = vmatpush1.msra.mxu0 0.0
        %303 = vmatprep.subr.mxu0 0.0
        %304 = vmatpush1.msra.mxu0 0.0
        %305 = vmatprep.subr.mxu0 0.0
        %306 = vmatpush1.msra.mxu0 0.0
        %307 = vmatprep.subr.mxu0 0.0
        %308 = vmatpush1.msra.mxu0 0.0
        %309 = vmatprep.subr.mxu0 0.0
        %310 = vmatpush1.msra.mxu0 %v273
        %311 = vmatprep.subr.mxu0 0.0
        %312 = vmatpush1.msra.mxu0 %v272
        %313 = vmatprep.subr.mxu0 0.0
        %314 = vmatpush1.msra.mxu0 %v271
        %315 = vmatprep.subr.mxu0 0.0
        %316 = vmatpush1.msra.mxu0 %v270
        %317 = vmatprep.subr.mxu0 0.0
        %318 = vmatpush2.msra.mxu0 0.0
        %319 = vmatprep.subr.mxu0 0.0
        %320 = vmatpush2.msra.mxu0 0.0
        %321 = vmatprep.subr.mxu0 0.0
        %322 = vmatpush2.msra.mxu0 0.0
        %323 = vmatprep.subr.mxu0 0.0
        %324 = vmatpush2.msra.mxu0 0.0
        %325 = vmatprep.subr.mxu0 0.0
        %326 = vmatpush2.msra.mxu0 0.0
        %327 = vmatprep.subr.mxu0 0.0
        %328 = vmatpush2.msra.mxu0 0.0
        %329 = vmatprep.subr.mxu0 0.0
        %330 = vmatpush2.msra.mxu0 0.0
        %331 = vmatprep.subr.mxu0 0.0
        %332 = vmatpush2.msra.mxu0 0.0
        %333 = vmatprep.subr.mxu0 0.0
        %334 = vmatpush2.msra.mxu0 0.0
        %335 = vmatprep.subr.mxu0 0.0
        %336 = vmatpush2.msra.mxu0 0.0
        %337 = vmatprep.subr.mxu0 0.0
        %338 = vmatpush2.msra.mxu0 0.0
        %339 = vmatprep.subr.mxu0 0.0
        %340 = vmatpush2.msra.mxu0 0.0
        %341 = vmatprep.subr.mxu0 0.0
        %342 = vmatpush2.msra.mxu0 0.0
        %343 = vmatprep.subr.mxu0 0.0
        %344 = vmatpush2.msra.mxu0 0.0
        %345 = vmatprep.subr.mxu0 0.0
        %346 = vmatpush2.msra.mxu0 0.0
        %347 = vmatprep.subr.mxu0 0.0
        %348 = vmatpush2.msra.mxu0 0.0
        %349 = vmatprep.mubr.f32.mxu0 0.0
        %350 = vmatmul.mubr.f32.gmra.mxu0 %v283
        %v351 = vpop.f32.mrf.mxu0
        %v352 = vadd.f32 %v279, %v351
        %v353 = vpop.f32.mrf.mxu0
        %354 = vdwg.mxu0
        %v355 = vtanh.pop %v352
        %v356 = vld [vmem:[#allocation6] sm:$0xff]
        %v357 = vld [vmem:[#allocation6 + $0x8] sm:$0xff]
        %v358 = vld [vmem:[#allocation6 + $0x10] sm:$0xff]
        %v359 = vld [vmem:[#allocation6 + $0x18] sm:$0xff]
        %v360 = vld [vmem:[%s4] sm:$0x1]
        %v362 = vlaneseq
        %v363 = vshrl.u32 %v362, 7
        %v364 = vsub.s32 0, %v363
        %v365 = vrot.slane %v360, %v364
        %v368 = vsel %vm281, %v355, 0
        %370 = vmatprep.subr.mxu0 0.0
        %371 = vmatpush1.msra.mxu0 0.0
        %372 = vmatprep.subr.mxu0 0.0
        %373 = vmatpush1.msra.mxu0 0.0
        %374 = vmatprep.subr.mxu0 0.0
        %375 = vmatpush1.msra.mxu0 0.0
        %376 = vmatprep.subr.mxu0 0.0
        %377 = vmatpush1.msra.mxu0 0.0
        %378 = vmatprep.subr.mxu0 0.0
        %379 = vmatpush1.msra.mxu0 0.0
        %380 = vmatprep.subr.mxu0 0.0
        %381 = vmatpush1.msra.mxu0 0.0
        %382 = vmatprep.subr.mxu0 0.0
        %383 = vmatpush1.msra.mxu0 0.0
        %384 = vmatprep.subr.mxu0 0.0
        %385 = vmatpush1.msra.mxu0 0.0
        %386 = vmatprep.subr.mxu0 0.0
        %387 = vmatpush1.msra.mxu0 0.0
        %388 = vmatprep.subr.mxu0 0.0
        %389 = vmatpush1.msra.mxu0 0.0
        %390 = vmatprep.subr.mxu0 0.0
        %391 = vmatpush1.msra.mxu0 0.0
        %392 = vmatprep.subr.mxu0 0.0
        %393 = vmatpush1.msra.mxu0 0.0
        %394 = vmatprep.subr.mxu0 0.0
        %395 = vmatpush1.msra.mxu0 %v359
        %396 = vmatprep.subr.mxu0 0.0
        %397 = vmatpush1.msra.mxu0 %v358
        %398 = vmatprep.subr.mxu0 0.0
        %399 = vmatpush1.msra.mxu0 %v357
        %400 = vmatprep.subr.mxu0 0.0
        %401 = vmatpush1.msra.mxu0 %v356
        %402 = vmatprep.subr.mxu0 0.0
        %403 = vmatpush2.msra.mxu0 0.0
        %404 = vmatprep.subr.mxu0 0.0
        %405 = vmatpush2.msra.mxu0 0.0
        %406 = vmatprep.subr.mxu0 0.0
        %407 = vmatpush2.msra.mxu0 0.0
        %408 = vmatprep.subr.mxu0 0.0
        %409 = vmatpush2.msra.mxu0 0.0
        %410 = vmatprep.subr.mxu0 0.0
        %411 = vmatpush2.msra.mxu0 0.0
        %412 = vmatprep.subr.mxu0 0.0
        %413 = vmatpush2.msra.mxu0 0.0
        %414 = vmatprep.subr.mxu0 0.0
        %415 = vmatpush2.msra.mxu0 0.0
        %416 = vmatprep.subr.mxu0 0.0
        %417 = vmatpush2.msra.mxu0 0.0
        %418 = vmatprep.subr.mxu0 0.0
        %419 = vmatpush2.msra.mxu0 0.0
        %420 = vmatprep.subr.mxu0 0.0
        %421 = vmatpush2.msra.mxu0 0.0
        %422 = vmatprep.subr.mxu0 0.0
        %423 = vmatpush2.msra.mxu0 0.0
        %424 = vmatprep.subr.mxu0 0.0
        %425 = vmatpush2.msra.mxu0 0.0
        %426 = vmatprep.subr.mxu0 0.0
        %427 = vmatpush2.msra.mxu0 0.0
        %428 = vmatprep.subr.mxu0 0.0
        %429 = vmatpush2.msra.mxu0 0.0
        %430 = vmatprep.subr.mxu0 0.0
        %431 = vmatpush2.msra.mxu0 0.0
        %432 = vmatprep.subr.mxu0 0.0
        %433 = vmatpush2.msra.mxu0 0.0
        %434 = vmatprep.mubr.f32.mxu0 0.0
        %435 = vmatmul.mubr.f32.gmra.mxu0 %v368
        %v436 = vpop.f32.mrf.mxu0
        %v437 = vadd.f32 %v365, %v436
        %v438 = vpop.f32.mrf.mxu0
        %439 = vdwg.mxu0
        %vm440 = vcmask 48128
        %441 = vst.msk [vmem:[%s268] sm:$0xff] %vm440, %v437
        %p442 = scmp.lt.s32.totalorder %s20, 1
        %s443 = scalar_select %p442, %s20, 1
        %s444 = smul.addr %s443, 8
        %s445 = scalar_lea.vmem %s5, %s444
        // Predicated region
        $region53: #{tpu_custom_call.1} parent=39 // pred_check
          %p446 = pneg %p148
        $region54: #{tpu_custom_call.1} parent=39 // pred_check_branch
          %448 = sbr.rel (%p446) target = $region56
        $region55: #{tpu_custom_call.1} parent=39 // pred_region
          _
        $region56: #{tpu_custom_call.1} parent=39 // pred_fallthru
          _
      $region40: #{tpu_custom_call.1} parent=5 // pred_fallthru
        _
      %p449 = scmp.le.s32.totalorder 2, %s15
      // Predicated region
      $region57: #{tpu_custom_call.1} parent=5 // pred_check
        %p450 = pneg %p449
      $region58: #{tpu_custom_call.1} parent=5 // pred_check_branch
        %452 = sbr.rel (%p450) target = $region60
      $region59: #{tpu_custom_call.1} parent=5 // pred_region
        %s453 = ssub.s32 %s15, 2
        // Predicated region
        $region61: #{tpu_custom_call.1} parent=59 // pred_check
          %p454 = pneg %p154
        $region62: #{tpu_custom_call.1} parent=59 // pred_check_branch
          %456 = sbr.rel (%p454) target = $region64
        $region63: #{tpu_custom_call.1} parent=59 // pred_region
          %p457 = scmp.lt.s32.totalorder %s21, 1
          %s458 = scalar_select %p457, %s21, 1
          %s459 = smul.addr %s458, 8
          %s460 = scalar_lea.vmem %s5, %s459
        $region64: #{tpu_custom_call.1} parent=59 // pred_fallthru
          _
      $region60: #{tpu_custom_call.1} parent=5 // pred_fallthru
        _
    $region6: #{tpu_custom_call.1} parent=1 // loop_footer
      %s19 = sadd.s32 1, %s15
    $region7: #{tpu_custom_call.1} parent=1 // loop_footer_branch
      %14 = sbr.rel target = $region3
    $region8: #{tpu_custom_call.1} parent=1 // loop_exit
      _
    %461 = vsyncpa [#allocation3], 1
    %s462 = scalar_lea.sflag [#allocation3], 1
    %463 = vsyncpa %s462, 1
    %464 = vsyncpa [#allocation5], 1

// kernel: tpu_custom_call.1
$region0: #{tpu_custom_call.1}
  #allocation0 [shape = 'u32[]', space=smem, size = 0x4, offset = 0x4, fixed_abs, tag = 'smem constant byte address 0x4 - core index']
  #allocation1 [shape = 'u32[144,128]{1,0:T(1,128)}', space=vmem, size = 0x12000, scoped, tag = 'internal scratch']
  %s0 = inlined_call_operand.hbm [shape: f32[16,32], index: 0, kind: input, shape index: {}]
  %s1 = inlined_call_operand.hbm [shape: f32[32,32], index: 1, kind: input, shape index: {}]
  %s2 = inlined_call_operand.vmem [shape: f32[1,32], index: 2, kind: input, shape index: {}]
  %s3 = inlined_call_operand.hbm [shape: f32[32,128], index: 3, kind: input, shape index: {}]
  %s4 = inlined_call_operand.vmem [shape: f32[1,128], index: 4, kind: input, shape index: {}]
  %s5 = inlined_call_operand.vmem [shape: f32[16,6], index: 5, kind: output, shape index: {}]
  %s6 = sld [smem:[#allocation0]]
  $region65: #{tpu_custom_call.1} parent=0
    _
  %s8 = ssub.s32 1, %s6
  %s9 = scalar_select 0, %s8, %s6
  $region1: #{tpu_custom_call.1} parent=0
    #allocation2 [shape = 'u8[8192]{0}', space=vmem, size = 0x2000, scoped, tag = 'input window, operand 0']
    #allocation3 [shape = 's32[2]{0}', space=sflag, size = 0x8, scoped, tag = 'scoped memory for tpu_custom_call.1']
    #allocation4 [shape = 'u8[16384]{0}', space=vmem, size = 0x4000, scoped, tag = 'input window, operand 1, single buffered']
    #allocation5 [shape = 's32[1]{0}', space=sflag, size = 0x4, scoped, tag = 'scoped memory for tpu_custom_call.1']
    #allocation6 [shape = 'u8[16384]{0}', space=vmem, size = 0x4000, scoped, tag = 'input window, operand 3, single buffered']
    %10 = vsyncpa [#allocation3], 0
    %s11 = scalar_lea.sflag [#allocation3], 1
    %12 = vsyncpa %s11, 0
    %13 = vsyncpa [#allocation5], 0
    loop: start=0, step=1, limit=4
    $region2: #{tpu_custom_call.1} parent=1 // loop_pre_header
      _
    $region3: #{tpu_custom_call.1} parent=1 // loop_header
      %s15 = sphi 0, %s19
      %p16 = scmp.ge.s32.totalorder %s15, 4
      %s25 = sphi 0, %s27
      %s28 = sphi 0, %s25
      %s29 = sphi 0, %s28
      %s45 = sphi 0, %s29
      %s49 = sphi 0, %s49
      %s51 = sphi 0, %s49
      %s52 = sphi 0, %s51
      %s66 = sphi 0, %s52
      %s70 = sphi 0, %s70
      %s72 = sphi 0, %s70
      %s73 = sphi 0, %s72
      %s87 = sphi 0, %s73
      %s91 = sphi 0, %s91
      %s93 = sphi 0, %s91
      %s94 = sphi 0, %s93
      %s108 = sphi 0, %s94
      %s112 = sphi 0, %s112
      %s114 = sphi 0, %s112
      %s115 = sphi 0, %s114
      %s129 = sphi 0, %s115
      %s135 = sphi 0, %s137
      %s138 = sphi 0, %s135
      %s139 = sphi 0, %s138
      %s155 = sphi 0, %s139
    $region4: #{tpu_custom_call.1} parent=1 // loop_header_branch
      %18 = sbr.rel (%p16) target = $region8
    $region5: #{tpu_custom_call.1} parent=1 // loop_body
      %s20 = ssub.s32 %s15, 1
      %s21 = ssub.s32 %s15, 2
      %s22 = sadd.s32 %s15, 1
      %s23 = ssub.s32 %s15, %s22
      %p24 = scmp.eq.s32.totalorder %s23, 0
      %s26 = sadd.s32 %s25, 1
      %s27 = scalar_select %p24, %s25, %s26
      %p30 = pneg %p24
      %p31 = scmp.eq.s32.totalorder %s15, 1
      %p32 = por %p30, %p31
      %p33 = scmp.ne.s32.totalorder %s25, %s28
      %p34 = scmp.eq.s32.totalorder %s15, 0
      %p35 = por %p33, %p34
      %p36 = scmp.ne.s32.totalorder %s25, %s28
      %p37 = scmp.eq.s32.totalorder %s20, 1
      %p38 = por %p36, %p37
      %p39 = scmp.ne.s32.totalorder %s28, %s29
      %p40 = scmp.eq.s32.totalorder %s20, 0
      %p41 = por %p39, %p40
      %p42 = scmp.ne.s32.totalorder %s28, %s29
      %p43 = scmp.eq.s32.totalorder %s21, 1
      %p44 = por %p42, %p43
      %p46 = scmp.ne.s32.totalorder %s29, %s45
      %p47 = scmp.eq.s32.totalorder %s21, 0
      %p48 = por %p46, %p47
      %s50 = sadd.s32 %s49, 1
      %p53 = scmp.eq.s32.totalorder %s15, 1
      %p54 = scmp.ne.s32.totalorder %s49, %s51
      %p55 = scmp.eq.s32.totalorder %s15, 0
      %p56 = por %p54, %p55
      %p57 = scmp.ne.s32.totalorder %s49, %s51
      %p58 = scmp.eq.s32.totalorder %s20, 1
      %p59 = por %p57, %p58
      %p60 = scmp.ne.s32.totalorder %s51, %s52
      %p61 = scmp.eq.s32.totalorder %s20, 0
      %p62 = por %p60, %p61
      %p63 = scmp.ne.s32.totalorder %s51, %s52
      %p64 = scmp.eq.s32.totalorder %s21, 1
      %p65 = por %p63, %p64
      %p67 = scmp.ne.s32.totalorder %s52, %s66
      %p68 = scmp.eq.s32.totalorder %s21, 0
      %p69 = por %p67, %p68
      %s71 = sadd.s32 %s70, 1
      %p74 = scmp.eq.s32.totalorder %s15, 1
      %p75 = scmp.ne.s32.totalorder %s70, %s72
      %p76 = scmp.eq.s32.totalorder %s15, 0
      %p77 = por %p75, %p76
      %p78 = scmp.ne.s32.totalorder %s70, %s72
      %p79 = scmp.eq.s32.totalorder %s20, 1
      %p80 = por %p78, %p79
      %p81 = scmp.ne.s32.totalorder %s72, %s73
      %p82 = scmp.eq.s32.totalorder %s20, 0
      %p83 = por %p81, %p82
      %p84 = scmp.ne.s32.totalorder %s72, %s73
      %p85 = scmp.eq.s32.totalorder %s21, 1
      %p86 = por %p84, %p85
      %p88 = scmp.ne.s32.totalorder %s73, %s87
      %p89 = scmp.eq.s32.totalorder %s21, 0
      %p90 = por %p88, %p89
      %s92 = sadd.s32 %s91, 1
      %p95 = scmp.eq.s32.totalorder %s15, 1
      %p96 = scmp.ne.s32.totalorder %s91, %s93
      %p97 = scmp.eq.s32.totalorder %s15, 0
      %p98 = por %p96, %p97
      %p99 = scmp.ne.s32.totalorder %s91, %s93
      %p100 = scmp.eq.s32.totalorder %s20, 1
      %p101 = por %p99, %p100
      %p102 = scmp.ne.s32.totalorder %s93, %s94
      %p103 = scmp.eq.s32.totalorder %s20, 0
      %p104 = por %p102, %p103
      %p105 = scmp.ne.s32.totalorder %s93, %s94
      %p106 = scmp.eq.s32.totalorder %s21, 1
      %p107 = por %p105, %p106
      %p109 = scmp.ne.s32.totalorder %s94, %s108
      %p110 = scmp.eq.s32.totalorder %s21, 0
      %p111 = por %p109, %p110
      %s113 = sadd.s32 %s112, 1
      %p116 = scmp.eq.s32.totalorder %s15, 1
      %p117 = scmp.ne.s32.totalorder %s112, %s114
      %p118 = scmp.eq.s32.totalorder %s15, 0
      %p119 = por %p117, %p118
      %p120 = scmp.ne.s32.totalorder %s112, %s114
      %p121 = scmp.eq.s32.totalorder %s20, 1
      %p122 = por %p120, %p121
      %p123 = scmp.ne.s32.totalorder %s114, %s115
      %p124 = scmp.eq.s32.totalorder %s20, 0
      %p125 = por %p123, %p124
      %p126 = scmp.ne.s32.totalorder %s114, %s115
      %p127 = scmp.eq.s32.totalorder %s21, 1
      %p128 = por %p126, %p127
      %p130 = scmp.ne.s32.totalorder %s115, %s129
      %p131 = scmp.eq.s32.totalorder %s21, 0
      %p132 = por %p130, %p131
      %s133 = ssub.s32 %s15, %s22
      %p134 = scmp.eq.s32.totalorder %s133, 0
      %s136 = sadd.s32 %s135, 1
      %s137 = scalar_select %p134, %s135, %s136
      %p140 = pneg %p134
      %p141 = scmp.eq.s32.totalorder %s15, 1
      %p142 = por %p140, %p141
      %p143 = scmp.ne.s32.totalorder %s135, %s138
      %p144 = scmp.eq.s32.totalorder %s15, 0
      %p145 = por %p143, %p144
      %p146 = scmp.ne.s32.totalorder %s135, %s138
      %p147 = scmp.eq.s32.totalorder %s20, 1
      %p148 = por %p146, %p147
      %p149 = scmp.ne.s32.totalorder %s138, %s139
      %p150 = scmp.eq.s32.totalorder %s20, 0
      %p151 = por %p149, %p150
      %p152 = scmp.ne.s32.totalorder %s138, %s139
      %p153 = scmp.eq.s32.totalorder %s21, 1
      %p154 = por %p152, %p153
      %p156 = scmp.ne.s32.totalorder %s139, %s155
      %p157 = scmp.eq.s32.totalorder %s21, 0
      %p158 = por %p156, %p157
      %p159 = scmp.le.s32.totalorder 1, %s15
      %p160 = scmp.lt.s32.totalorder %s15, 3
      %p161 = pnand %p159, %p160
      %p162 = pneg %p161
      // Predicated region
      $region9: #{tpu_custom_call.1} parent=5 // pred_check
        _
      $region10: #{tpu_custom_call.1} parent=5 // pred_check_branch
        %164 = sbr.rel (%p161) target = $region12
      $region11: #{tpu_custom_call.1} parent=5 // pred_region
        %s165 = ssub.s32 %s15, 1
        // Predicated region
        $region13: #{tpu_custom_call.1} parent=11 // pred_check
          %p166 = pneg %p62
        $region14: #{tpu_custom_call.1} parent=11 // pred_check_branch
          %168 = sbr.rel (%p166) target = $region16
        $region15: #{tpu_custom_call.1} parent=11 // pred_region
          %s170 = ssub.s32 512, 512
          %171 = vsyncadd [#allocation5], %s170
          %s172 = sshll.u32 [#allocation4], 4
          %s173 = int_to_ptr.vmem [resolvable:$true] %s172
          %178 = dma.hbm_to_vmem [thread:$0]  %s1, 512, %s173, [#allocation5], 128, 128, 8
        $region16: #{tpu_custom_call.1} parent=11 // pred_fallthru
          _
        // Predicated region
        $region17: #{tpu_custom_call.1} parent=11 // pred_check
          %p179 = pneg %p83
        $region18: #{tpu_custom_call.1} parent=11 // pred_check_branch
          %181 = sbr.rel (%p179) target = $region20
        $region19: #{tpu_custom_call.1} parent=11 // pred_region
          _
        $region20: #{tpu_custom_call.1} parent=11 // pred_fallthru
          _
        // Predicated region
        $region21: #{tpu_custom_call.1} parent=11 // pred_check
          %p182 = pneg %p104
        $region22: #{tpu_custom_call.1} parent=11 // pred_check_branch
          %184 = sbr.rel (%p182) target = $region24
        $region23: #{tpu_custom_call.1} parent=11 // pred_region
          %s186 = ssub.s32 512, 512
          %187 = vsyncadd [#allocation5], %s186
          %s188 = sshll.u32 [#allocation6], 4
          %s189 = int_to_ptr.vmem [resolvable:$true] %s188
          %194 = dma.hbm_to_vmem [thread:$0]  %s3, 512, %s189, [#allocation5], 128, 128, 8
        $region24: #{tpu_custom_call.1} parent=11 // pred_fallthru
          _
        // Predicated region
        $region25: #{tpu_custom_call.1} parent=11 // pred_check
          %p195 = pneg %p125
        $region26: #{tpu_custom_call.1} parent=11 // pred_check_branch
          %197 = sbr.rel (%p195) target = $region28
        $region27: #{tpu_custom_call.1} parent=11 // pred_region
          _
        $region28: #{tpu_custom_call.1} parent=11 // pred_fallthru
          _
      $region12: #{tpu_custom_call.1} parent=5 // pred_fallthru
        _
      %p198 = scmp.lt.s32.totalorder %s15, 2
      // Predicated region
      $region29: #{tpu_custom_call.1} parent=5 // pred_check
        %p199 = pneg %p198
      $region30: #{tpu_custom_call.1} parent=5 // pred_check_branch
        %201 = sbr.rel (%p199) target = $region32
      $region31: #{tpu_custom_call.1} parent=5 // pred_region
        // Predicated region
        $region33: #{tpu_custom_call.1} parent=31 // pred_check
          %p202 = pneg %p35
        $region34: #{tpu_custom_call.1} parent=31 // pred_check_branch
          %204 = sbr.rel (%p202) target = $region36
        $region35: #{tpu_custom_call.1} parent=31 // pred_region
          %s205 = sand.u32 %s25, 1
          %s206 = scalar_lea.sflag [#allocation3], %s205
          %s207 = sand.u32 %s25, 1
          %s208 = smul.addr %s207, 8
          %s209 = scalar_lea.vmem [#allocation2], %s208
          %s211 = ssub.s32 128, 128
          %212 = vsyncadd %s206, %s211
          %s213 = smul.addr %s15, 128
          %s214 = scalar_lea.hbm %s0, %s213
          %s216 = sshll.u32 %s209, 4
          %s217 = int_to_ptr.vmem [resolvable:$true] %s216
          %219 = dma.hbm_to_vmem [thread:$0]  %s214, 128, %s217, %s206
        $region36: #{tpu_custom_call.1} parent=31 // pred_fallthru
          _
      $region32: #{tpu_custom_call.1} parent=5 // pred_fallthru
        _
      %p220 = scmp.le.s32.totalorder 1, %s15
      %p221 = scmp.lt.s32.totalorder %s15, 3
      %p222 = pnand %p220, %p221
      %p223 = pneg %p222
      // Predicated region
      $region37: #{tpu_custom_call.1} parent=5 // pred_check
        _
      $region38: #{tpu_custom_call.1} parent=5 // pred_check_branch
        %225 = sbr.rel (%p222) target = $region40
      $region39: #{tpu_custom_call.1} parent=5 // pred_region
        %s226 = ssub.s32 %s15, 1
        %s227 = sand.u32 %s28, 1
        %s228 = scalar_lea.sflag [#allocation3], %s227
        %s229 = sand.u32 %s28, 1
        %s230 = smul.addr %s229, 8
        %s231 = scalar_lea.vmem [#allocation2], %s230
        // Predicated region
        $region41: #{tpu_custom_call.1} parent=39 // pred_check
          %p232 = pneg %p41
        $region42: #{tpu_custom_call.1} parent=39 // pred_check_branch
          %234 = sbr.rel (%p232) target = $region44
        $region43: #{tpu_custom_call.1} parent=39 // pred_region
          %235 = dma.done %s228, 128
        $region44: #{tpu_custom_call.1} parent=39 // pred_fallthru
          _
        // Predicated region
        $region45: #{tpu_custom_call.1} parent=39 // pred_check
          %p236 = pneg %p62
        $region46: #{tpu_custom_call.1} parent=39 // pred_check_branch
          %238 = sbr.rel (%p236) target = $region48
        $region47: #{tpu_custom_call.1} parent=39 // pred_region
          %239 = dma.done [#allocation5], 512
        $region48: #{tpu_custom_call.1} parent=39 // pred_fallthru
          _
        // Predicated region
        $region49: #{tpu_custom_call.1} parent=39 // pred_check
          %p240 = pneg %p104
        $region50: #{tpu_custom_call.1} parent=39 // pred_check_branch
          %242 = sbr.rel (%p240) target = $region52
        $region51: #{tpu_custom_call.1} parent=39 // pred_region
          %243 = dma.done [#allocation5], 512
        $region52: #{tpu_custom_call.1} parent=39 // pred_fallthru
          _
        %s244 = sand.u32 %s28, 1
        %s245 = scalar_lea.sflag [#allocation3], %s244
        %s246 = sand.u32 %s28, 1
        %s247 = smul.addr %s246, 8
        %s248 = scalar_lea.vmem [#allocation2], %s247
        %p249 = pneg %p41
        %p250 = pneg %p38
        %p251 = pneg %p62
        %p252 = pneg %p59
        %p253 = pneg %p83
        %p254 = pneg %p80
        %p255 = pneg %p104
        %p256 = pneg %p101
        %p257 = pneg %p125
        %p258 = pneg %p122
        %p259 = pneg %p151
        %p260 = pneg %p148
        %p261 = scmp.lt.s32.totalorder %s20, 1
        %s262 = scalar_select %p261, %s20, 1
        %s263 = smul.addr %s262, 8
        %s264 = scalar_lea.vmem %s5, %s263
        %p265 = scmp.lt.s32.totalorder %s20, 1
        %s266 = scalar_select %p265, %s20, 1
        %s267 = smul.addr %s266, 8
        %s268 = scalar_lea.vmem %s5, %s267
        %v269 = vld [vmem:[%s231] sm:$0xff]
        %v270 = vld [vmem:[#allocation4] sm:$0xff]
        %v271 = vld [vmem:[#allocation4 + $0x8] sm:$0xff]
        %v272 = vld [vmem:[#allocation4 + $0x10] sm:$0xff]
        %v273 = vld [vmem:[#allocation4 + $0x18] sm:$0xff]
        %v274 = vld [vmem:[%s2] sm:$0x1]
        %v276 = vlaneseq
        %v277 = vshrl.u32 %v276, 7
        %v278 = vsub.s32 0, %v277
        %v279 = vrot.slane %v274, %v278
        %vm281 = vcmask 261120
        %v283 = vsel %vm281, %v269, 0
        %285 = vmatprep.subr.mxu0 0.0
        %286 = vmatpush1.msra.mxu0 0.0
        %287 = vmatprep.subr.mxu0 0.0
        %288 = vmatpush1.msra.mxu0 0.0
        %289 = vmatprep.subr.mxu0 0.0
        %290 = vmatpush1.msra.mxu0 0.0
        %291 = vmatprep.subr.mxu0 0.0
        %292 = vmatpush1.msra.mxu0 0.0
        %293 = vmatprep.subr.mxu0 0.0
        %294 = vmatpush1.msra.mxu0 0.0
        %295 = vmatprep.subr.mxu0 0.0
        %296 = vmatpush1.msra.mxu0 0.0
        %297 = vmatprep.subr.mxu0 0.0
        %298 = vmatpush1.msra.mxu0 0.0
        %299 = vmatprep.subr.mxu0 0.0
        %300 = vmatpush1.msra.mxu0 0.0
        %301 = vmatprep.subr.mxu0 0.0
        %302 = vmatpush1.msra.mxu0 0.0
        %303 = vmatprep.subr.mxu0 0.0
        %304 = vmatpush1.msra.mxu0 0.0
        %305 = vmatprep.subr.mxu0 0.0
        %306 = vmatpush1.msra.mxu0 0.0
        %307 = vmatprep.subr.mxu0 0.0
        %308 = vmatpush1.msra.mxu0 0.0
        %309 = vmatprep.subr.mxu0 0.0
        %310 = vmatpush1.msra.mxu0 %v273
        %311 = vmatprep.subr.mxu0 0.0
        %312 = vmatpush1.msra.mxu0 %v272
        %313 = vmatprep.subr.mxu0 0.0
        %314 = vmatpush1.msra.mxu0 %v271
        %315 = vmatprep.subr.mxu0 0.0
        %316 = vmatpush1.msra.mxu0 %v270
        %317 = vmatprep.subr.mxu0 0.0
        %318 = vmatpush2.msra.mxu0 0.0
        %319 = vmatprep.subr.mxu0 0.0
        %320 = vmatpush2.msra.mxu0 0.0
        %321 = vmatprep.subr.mxu0 0.0
        %322 = vmatpush2.msra.mxu0 0.0
        %323 = vmatprep.subr.mxu0 0.0
        %324 = vmatpush2.msra.mxu0 0.0
        %325 = vmatprep.subr.mxu0 0.0
        %326 = vmatpush2.msra.mxu0 0.0
        %327 = vmatprep.subr.mxu0 0.0
        %328 = vmatpush2.msra.mxu0 0.0
        %329 = vmatprep.subr.mxu0 0.0
        %330 = vmatpush2.msra.mxu0 0.0
        %331 = vmatprep.subr.mxu0 0.0
        %332 = vmatpush2.msra.mxu0 0.0
        %333 = vmatprep.subr.mxu0 0.0
        %334 = vmatpush2.msra.mxu0 0.0
        %335 = vmatprep.subr.mxu0 0.0
        %336 = vmatpush2.msra.mxu0 0.0
        %337 = vmatprep.subr.mxu0 0.0
        %338 = vmatpush2.msra.mxu0 0.0
        %339 = vmatprep.subr.mxu0 0.0
        %340 = vmatpush2.msra.mxu0 0.0
        %341 = vmatprep.subr.mxu0 0.0
        %342 = vmatpush2.msra.mxu0 0.0
        %343 = vmatprep.subr.mxu0 0.0
        %344 = vmatpush2.msra.mxu0 0.0
        %345 = vmatprep.subr.mxu0 0.0
        %346 = vmatpush2.msra.mxu0 0.0
        %347 = vmatprep.subr.mxu0 0.0
        %348 = vmatpush2.msra.mxu0 0.0
        %349 = vmatprep.mubr.f32.mxu0 0.0
        %350 = vmatmul.mubr.f32.gmra.mxu0 %v283
        %v351 = vpop.f32.mrf.mxu0
        %v352 = vadd.f32 %v279, %v351
        %v353 = vpop.f32.mrf.mxu0
        %354 = vdwg.mxu0
        %v355 = vtanh.pop %v352
        %v356 = vld [vmem:[#allocation6] sm:$0xff]
        %v357 = vld [vmem:[#allocation6 + $0x8] sm:$0xff]
        %v358 = vld [vmem:[#allocation6 + $0x10] sm:$0xff]
        %v359 = vld [vmem:[#allocation6 + $0x18] sm:$0xff]
        %v360 = vld [vmem:[%s4] sm:$0x1]
        %v362 = vlaneseq
        %v363 = vshrl.u32 %v362, 7
        %v364 = vsub.s32 0, %v363
        %v365 = vrot.slane %v360, %v364
        %v368 = vsel %vm281, %v355, 0
        %370 = vmatprep.subr.mxu0 0.0
        %371 = vmatpush1.msra.mxu0 0.0
        %372 = vmatprep.subr.mxu0 0.0
        %373 = vmatpush1.msra.mxu0 0.0
        %374 = vmatprep.subr.mxu0 0.0
        %375 = vmatpush1.msra.mxu0 0.0
        %376 = vmatprep.subr.mxu0 0.0
        %377 = vmatpush1.msra.mxu0 0.0
        %378 = vmatprep.subr.mxu0 0.0
        %379 = vmatpush1.msra.mxu0 0.0
        %380 = vmatprep.subr.mxu0 0.0
        %381 = vmatpush1.msra.mxu0 0.0
        %382 = vmatprep.subr.mxu0 0.0
        %383 = vmatpush1.msra.mxu0 0.0
        %384 = vmatprep.subr.mxu0 0.0
        %385 = vmatpush1.msra.mxu0 0.0
        %386 = vmatprep.subr.mxu0 0.0
        %387 = vmatpush1.msra.mxu0 0.0
        %388 = vmatprep.subr.mxu0 0.0
        %389 = vmatpush1.msra.mxu0 0.0
        %390 = vmatprep.subr.mxu0 0.0
        %391 = vmatpush1.msra.mxu0 0.0
        %392 = vmatprep.subr.mxu0 0.0
        %393 = vmatpush1.msra.mxu0 0.0
        %394 = vmatprep.subr.mxu0 0.0
        %395 = vmatpush1.msra.mxu0 %v359
        %396 = vmatprep.subr.mxu0 0.0
        %397 = vmatpush1.msra.mxu0 %v358
        %398 = vmatprep.subr.mxu0 0.0
        %399 = vmatpush1.msra.mxu0 %v357
        %400 = vmatprep.subr.mxu0 0.0
        %401 = vmatpush1.msra.mxu0 %v356
        %402 = vmatprep.subr.mxu0 0.0
        %403 = vmatpush2.msra.mxu0 0.0
        %404 = vmatprep.subr.mxu0 0.0
        %405 = vmatpush2.msra.mxu0 0.0
        %406 = vmatprep.subr.mxu0 0.0
        %407 = vmatpush2.msra.mxu0 0.0
        %408 = vmatprep.subr.mxu0 0.0
        %409 = vmatpush2.msra.mxu0 0.0
        %410 = vmatprep.subr.mxu0 0.0
        %411 = vmatpush2.msra.mxu0 0.0
        %412 = vmatprep.subr.mxu0 0.0
        %413 = vmatpush2.msra.mxu0 0.0
        %414 = vmatprep.subr.mxu0 0.0
        %415 = vmatpush2.msra.mxu0 0.0
        %416 = vmatprep.subr.mxu0 0.0
        %417 = vmatpush2.msra.mxu0 0.0
        %418 = vmatprep.subr.mxu0 0.0
        %419 = vmatpush2.msra.mxu0 0.0
        %420 = vmatprep.subr.mxu0 0.0
        %421 = vmatpush2.msra.mxu0 0.0
        %422 = vmatprep.subr.mxu0 0.0
        %423 = vmatpush2.msra.mxu0 0.0
        %424 = vmatprep.subr.mxu0 0.0
        %425 = vmatpush2.msra.mxu0 0.0
        %426 = vmatprep.subr.mxu0 0.0
        %427 = vmatpush2.msra.mxu0 0.0
        %428 = vmatprep.subr.mxu0 0.0
        %429 = vmatpush2.msra.mxu0 0.0
        %430 = vmatprep.subr.mxu0 0.0
        %431 = vmatpush2.msra.mxu0 0.0
        %432 = vmatprep.subr.mxu0 0.0
        %433 = vmatpush2.msra.mxu0 0.0
        %434 = vmatprep.mubr.f32.mxu0 0.0
        %435 = vmatmul.mubr.f32.gmra.mxu0 %v368
        %v436 = vpop.f32.mrf.mxu0
        %v437 = vadd.f32 %v365, %v436
        %v438 = vpop.f32.mrf.mxu0
        %439 = vdwg.mxu0
        %vm440 = vcmask 48128
        %441 = vst.msk [vmem:[%s268] sm:$0xff] %vm440, %v437
        %p442 = scmp.lt.s32.totalorder %s20, 1
        %s443 = scalar_select %p442, %s20, 1
        %s444 = smul.addr %s443, 8
        %s445 = scalar_lea.vmem %s5, %s444
        // Predicated region
        $region53: #{tpu_custom_call.1} parent=39 // pred_check
          %p446 = pneg %p148
        $region54: #{tpu_custom_call.1} parent=39 // pred_check_branch
          %448 = sbr.rel (%p446) target = $region56
        $region55: #{tpu_custom_call.1} parent=39 // pred_region
          _
        $region56: #{tpu_custom_call.1} parent=39 // pred_fallthru
          _
      $region40: #{tpu_custom_call.1} parent=5 // pred_fallthru
        _
      %p449 = scmp.le.s32.totalorder 2, %s15
      // Predicated region
      $region57: #{tpu_custom_call.1} parent=5 // pred_check
        %p450 = pneg %p449
      $region58: #{tpu_custom_call.1} parent=5 // pred_check_branch
        %452 = sbr.rel (%p450) target = $region60
      $region59: #{tpu_custom_call.1} parent=5 // pred_region
        %s453 = ssub.s32 %s15, 2
        // Predicated region
        $region61: #{tpu_custom_call.1} parent=59 // pred_check
          %p454 = pneg %p154
        $region62: #{tpu_custom_call.1} parent=59 // pred_check_branch
          %456 = sbr.rel (%p454) target = $region64
        $region63: #{tpu_custom_call.1} parent=59 // pred_region
          %p457 = scmp.lt.s32.totalorder %s21, 1
          %s458 = scalar_select %p457, %s21, 1
          %s459 = smul.addr %s458, 8
          %s460 = scalar_lea.vmem %s5, %s459
        $region64: #{tpu_custom_call.1} parent=59 // pred_fallthru
          _
      $region60: #{tpu_custom_call.1} parent=5 // pred_fallthru
        _
    $region6: #{tpu_custom_call.1} parent=1 // loop_footer
      %s19 = sadd.s32 1, %s15
    $region7: #{tpu_custom_call.1} parent=1 // loop_footer_branch
      %14 = sbr.rel target = $region3
    $region8: #{tpu_custom_call.1} parent=1 // loop_exit
      _
    %461 = vsyncpa [#allocation3], 1
    %s462 = scalar_lea.sflag [#allocation3], 1
    %463 = vsyncpa %s462, 1
    %464 = vsyncpa [#allocation5], 1

</llo_original>
